<compile_context>
chip_gen: v5e
topology: v5e:2x2
jax: 0.10.0
libtpu: 0.0.40
codegen_flags: <defaults>
</compile_context>

<pallas_src>
import jax
import jax.numpy as jnp
from jax.experimental import pallas as pl
from jax.experimental.pallas import tpu as pltpu


def _joint_probe_kernel(emb_ref, w_ref, dist_ref, depth_ref):
    # emb_ref:   (Bt, S, D)   VMEM
    # w_ref:     (D, 2R)      VMEM   fused [proj_dist^T | proj_depth^T]
    # dist_ref:  (Bt, S, S)   VMEM   output (pairwise squared distances)
    # depth_ref: (Bt, 1, S)   VMEM   output (squared norms), lane-dense
    bt, s, d = emb_ref.shape
    r2 = w_ref.shape[1]
    r = r2 // 2

    # ---- fused projection: one MXU matmul for both probes ----
    emb2d = emb_ref[...].reshape(bt * s, d)                        # (Bt*S, D)
    proj = jnp.dot(emb2d, w_ref[...],
                   preferred_element_type=jnp.float32)             # (Bt*S, 2R)
    proj = proj.reshape(bt, s, r2)
    proj_dist = proj[:, :, :r]                                     # (Bt, S, R)
    proj_depth = proj[:, :, r:]                                    # (Bt, S, R)

    # ---- distance probe via Gram matrix (MXU) ----
    gram = jnp.einsum('bir,bjr->bij', proj_dist, proj_dist,
                      preferred_element_type=jnp.float32)          # (Bt, S, S)
    sq = jnp.sum(proj_dist * proj_dist, axis=-1)                   # (Bt, S)
    dist = sq[:, :, None] + sq[:, None, :] - 2.0 * gram
    dist_ref[...] = jnp.maximum(dist, 0.0)                         # clamp tiny negatives

    # ---- depth probe: squared norms of the depth half ----
    depths = jnp.sum(proj_depth * proj_depth, axis=-1)             # (Bt, S)
    depth_ref[...] = depths[:, None, :]                            # (Bt, 1, S)


def _pick_batch_tile(B, S, D, R, budget_bytes=24 * 1024 * 1024):
    """Largest divisor of B whose double-buffered blocks fit the VMEM budget."""
    def block_bytes(bt):
        emb = bt * S * D * 4
        dist = bt * S * S * 4
        depth = bt * S * 4
        w = D * 2 * R * 4
        return 2 * (emb + dist + depth + w)   # pipeline double-buffers each block

    bt = B
    while bt > 1 and block_bytes(bt) > budget_bytes:
        bt -= 1
        while bt > 1 and B % bt != 0:
            bt -= 1
    return max(bt, 1)


def joint_euclidean_probe(embeddings, proj_dist, proj_depth, task="both"):
    """Pallas implementation of JointEuclideanProbe.forward.

    embeddings: (B, S, D) float32
    proj_dist:  (R, D) float32   (distance_probe.proj)
    proj_depth: (R, D) float32   (depth_probe.proj)
    """
    B, S, D = embeddings.shape
    R, _ = proj_dist.shape

    # Pre-transpose + fuse the two projections once in the wrapper (layout
    # plumbing; avoids per-grid-step XLU transposes and halves MXU weight loads).
    w_fused = jnp.concatenate([proj_dist.T, proj_depth.T], axis=-1)  # (D, 2R)

    bt = _pick_batch_tile(B, S, D, R)
    grid = (B // bt,)

    distances, depths_3d = pl.pallas_call(
        _joint_probe_kernel,
        out_shape=(
            jax.ShapeDtypeStruct((B, S, S), jnp.float32),
            jax.ShapeDtypeStruct((B, 1, S), jnp.float32),   # lane-dense depths
        ),
        grid_spec=pltpu.PrefetchScalarGridSpec(
            num_scalar_prefetch=0,
            grid=grid,
            in_specs=[
                pl.BlockSpec((bt, S, D), lambda b: (b, 0, 0)),
                pl.BlockSpec((D, 2 * R), lambda b: (0, 0)),
            ],
            out_specs=[
                pl.BlockSpec((bt, S, S), lambda b: (b, 0, 0)),
                pl.BlockSpec((bt, 1, S), lambda b: (b, 0, 0)),
            ],
        ),
        compiler_params=pltpu.CompilerParams(
            dimension_semantics=("parallel",),
            vmem_limit_bytes=48 * 1024 * 1024,   # explicit, v7x-safe (< 64 MiB)
        ),
    )(embeddings, w_fused)

    depths = depths_3d[:, 0, :]                                   # (B, S)

    if task == "both":
        return distances, depths
    elif task == "distance":
        return distances
    elif task == "depth":
        return depths
    else:
        raise ValueError(f"Unknown task: {task}")


def _reference(embeddings, proj_dist, proj_depth):
    # pure-JAX reference mirroring the PyTorch code (explicit broadcast form)
    proj_d = embeddings @ proj_dist.T                     # (B, S, R)
    diff = proj_d[:, :, None, :] - proj_d[:, None, :, :]  # (B, S, S, R)
    distances = jnp.sum(diff ** 2, axis=-1)               # (B, S, S)
    proj_h = embeddings @ proj_depth.T                    # (B, S, R)
    depths = jnp.sum(proj_h ** 2, axis=-1)                # (B, S)
    return distances, depths


if __name__ == "__main__":
    B, S, D, R = 2, 8, 32, 16   # batch, seq_len, input_dim, probe_rank

    key = jax.random.PRNGKey(0)
    k_emb, k_pd, k_ph = jax.random.split(key, 3)

    embeddings = jax.random.normal(k_emb, (B, S, D), dtype=jnp.float32)
    # nn.init.uniform_(proj, -0.05, 0.05) for both probes (independent params)
    proj_dist = jax.random.uniform(k_pd, (R, D), dtype=jnp.float32,
                                   minval=-0.05, maxval=0.05)
    proj_depth = jax.random.uniform(k_ph, (R, D), dtype=jnp.float32,
                                    minval=-0.05, maxval=0.05)

    distances, depths = joint_euclidean_probe(embeddings, proj_dist, proj_depth,
                                              task="both")
    jax.block_until_ready((distances, depths))

    ref_dist, ref_depth = _reference(embeddings, proj_dist, proj_depth)
    assert distances.shape == (B, S, S)
    assert depths.shape == (B, S)
    # Gram-matrix distance is mathematically equivalent but admits small
    # cancellation error vs. the broadcast reference -> slightly relaxed atol.
    assert jnp.allclose(distances, ref_dist, atol=1e-4, rtol=1e-4)
    assert jnp.allclose(depths, ref_depth, atol=1e-5, rtol=1e-5)

    print("KERNEL_OK")
</pallas_src>

<mosaic_0001>
module attributes {stable_mosaic.version = 11 : i64} {
  func.func @_joint_probe_kernel(%arg0: i32, %arg1: memref<2x8x32xf32, #tpu.memory_space<vmem>>, %arg2: memref<32x32xf32, #tpu.memory_space<vmem>>, %arg3: memref<2x8x8xf32, #tpu.memory_space<vmem>>, %arg4: memref<2x1x8xf32, #tpu.memory_space<vmem>>) attributes {dimension_semantics = [#tpu.dimension_semantics<parallel>], iteration_bounds = array<i64: 1>, scalar_prefetch = 0 : i64, scratch_operands = 0 : i64, tpu.core_type = #tpu.core_type<tc>, window_params = [{transform_indices = @transform_0, window_bounds = array<i64: 2, 8, 32>}, {pipeline_mode = #tpu.pipeline_mode<synchronous>, transform_indices = @transform_1, window_bounds = array<i64: 32, 32>}, {transform_indices = @transform_2, window_bounds = array<i64: 2, 8, 8>}, {transform_indices = @transform_3, window_bounds = array<i64: 2, 1, 8>}]} {
    %c0 = arith.constant 0 : index
    %c0_0 = arith.constant 0 : index
    %c0_1 = arith.constant 0 : index
    %0 = vector.load %arg1[%c0, %c0_0, %c0_1] : memref<2x8x32xf32, #tpu.memory_space<vmem>>, vector<2x8x32xf32>
    %1 = vector.shape_cast %0 : vector<2x8x32xf32> to vector<16x32xf32>
    %c0_2 = arith.constant 0 : index
    %c0_3 = arith.constant 0 : index
    %2 = vector.load %arg2[%c0_2, %c0_3] : memref<32x32xf32, #tpu.memory_space<vmem>>, vector<32x32xf32>
    %cst = arith.constant dense<0.000000e+00> : vector<16x32xf32>
    %3 = tpu.matmul %1, %2, %cst {dimension_numbers = #tpu.dot_dimension_numbers<[1], [0], [0], [1], [0, 0, 1, 1], [], []>} : vector<16x32xf32>, vector<32x32xf32>, vector<16x32xf32> -> vector<16x32xf32>
    %4 = vector.shape_cast %3 : vector<16x32xf32> to vector<2x8x32xf32>
    %5 = vector.extract_strided_slice %4 {offsets = [0, 0, 0], sizes = [2, 8, 16], strides = [1, 1, 1]} : vector<2x8x32xf32> to vector<2x8x16xf32>
    %6 = vector.extract_strided_slice %4 {offsets = [0, 0, 16], sizes = [2, 8, 16], strides = [1, 1, 1]} : vector<2x8x32xf32> to vector<2x8x16xf32>
    "tpu.trace_start"() <{level = 10 : i32, message = "bir,bjr->bij"}> : () -> ()
    %cst_4 = arith.constant dense<0.000000e+00> : vector<2x8x8xf32>
    %7 = tpu.matmul %5, %5, %cst_4 {dimension_numbers = #tpu.dot_dimension_numbers<[2], [2], [1], [1], [0, 0, 0, 1, 1, 1], [0], [0]>} : vector<2x8x16xf32>, vector<2x8x16xf32>, vector<2x8x8xf32> -> vector<2x8x8xf32>
    "tpu.trace_stop"() : () -> ()
    %8 = arith.mulf %5, %5 : vector<2x8x16xf32>
    %cst_5 = arith.constant dense<0.000000e+00> : vector<2x8xf32>
    %9 = vector.multi_reduction <add>, %8, %cst_5 [2] : vector<2x8x16xf32> to vector<2x8xf32>
    %10 = vector.shape_cast %9 : vector<2x8xf32> to vector<2x8x1xf32>
    %11 = vector.shape_cast %9 : vector<2x8xf32> to vector<2x1x8xf32>
    %12 = vector.broadcast %10 : vector<2x8x1xf32> to vector<2x8x8xf32>
    %13 = vector.broadcast %11 : vector<2x1x8xf32> to vector<2x8x8xf32>
    %14 = arith.addf %12, %13 : vector<2x8x8xf32>
    %cst_6 = arith.constant 2.000000e+00 : f32
    %15 = vector.broadcast %cst_6 : f32 to vector<2x8x8xf32>
    %16 = arith.mulf %15, %7 : vector<2x8x8xf32>
    %17 = arith.subf %14, %16 : vector<2x8x8xf32>
    %cst_7 = arith.constant 0.000000e+00 : f32
    %18 = vector.broadcast %cst_7 : f32 to vector<2x8x8xf32>
    %19 = arith.maximumf %17, %18 : vector<2x8x8xf32>
    %c0_8 = arith.constant 0 : index
    %c0_9 = arith.constant 0 : index
    %c0_10 = arith.constant 0 : index
    %20 = vector.load %arg3[%c0_8, %c0_9, %c0_10] : memref<2x8x8xf32, #tpu.memory_space<vmem>>, vector<2x8x8xf32>
    tpu.vector_store %arg3[%c0_8, %c0_9, %c0_10], %19 {strides = array<i32>} : memref<2x8x8xf32, #tpu.memory_space<vmem>>, vector<2x8x8xf32>,
    %21 = arith.mulf %6, %6 : vector<2x8x16xf32>
    %cst_11 = arith.constant dense<0.000000e+00> : vector<2x8xf32>
    %22 = vector.multi_reduction <add>, %21, %cst_11 [2] : vector<2x8x16xf32> to vector<2x8xf32>
    %23 = vector.shape_cast %22 : vector<2x8xf32> to vector<2x1x8xf32>
    %c0_12 = arith.constant 0 : index
    %c0_13 = arith.constant 0 : index
    %c0_14 = arith.constant 0 : index
    %24 = vector.load %arg4[%c0_12, %c0_13, %c0_14] : memref<2x1x8xf32, #tpu.memory_space<vmem>>, vector<2x1x8xf32>
    tpu.vector_store %arg4[%c0_12, %c0_13, %c0_14], %23 {strides = array<i32>} : memref<2x1x8xf32, #tpu.memory_space<vmem>>, vector<2x1x8xf32>,
    return
  }
  func.func @transform_0(%arg0: i32) -> (i32, i32, i32) {
    %c0_i32 = arith.constant 0 : i32
    %c0_i32_0 = arith.constant 0 : i32
    %c0_i32_1 = arith.constant 0 : i32
    return %arg0, %c0_i32, %c0_i32_0 : i32, i32, i32
  }
  func.func @transform_1(%arg0: i32) -> (i32, i32) {
    %c0_i32 = arith.constant 0 : i32
    %c0_i32_0 = arith.constant 0 : i32
    %c0_i32_1 = arith.constant 0 : i32
    return %c0_i32, %c0_i32_0 : i32, i32
  }
  func.func @transform_2(%arg0: i32) -> (i32, i32, i32) {
    %c0_i32 = arith.constant 0 : i32
    %c0_i32_0 = arith.constant 0 : i32
    %c0_i32_1 = arith.constant 0 : i32
    return %arg0, %c0_i32, %c0_i32_0 : i32, i32, i32
  }
  func.func @transform_3(%arg0: i32) -> (i32, i32, i32) {
    %c0_i32 = arith.constant 0 : i32
    %c0_i32_0 = arith.constant 0 : i32
    %c0_i32_1 = arith.constant 0 : i32
    return %arg0, %c0_i32, %c0_i32_0 : i32, i32, i32
  }
}

</mosaic_0001>

<llo_original>
// kernel: tpu_custom_call.1
$region0: #{tpu_custom_call.1}
  #allocation0 [shape = 'u32[]', space=smem, size = 0x4, offset = 0x4, fixed_abs, tag = 'smem constant byte address 0x4 - core index']
  #allocation1 [shape = 'u32[72,128]{1,0:T(1,128)}', space=vmem, size = 0x9000, scoped, tag = 'internal scratch']
  %s0 = inlined_call_operand.hbm [shape: f32[2,8,32], index: 0, kind: input, shape index: {}]
  %s1 = inlined_call_operand.hbm [shape: f32[32,32], index: 1, kind: input, shape index: {}]
  %s2 = inlined_call_operand.hbm [shape: f32[2,8,8], index: 2, kind: output, shape index: {0}]
  %s3 = inlined_call_operand.hbm [shape: f32[2,1,8], index: 3, kind: output, shape index: {1}]
  %4 = xla_tuple %s2, %s3
  %s5 = sld [smem:[#allocation0]]
  $region34: #{tpu_custom_call.1} parent=0
    _
  %s7 = ssub.s32 1, %s5
  %s8 = scalar_select 0, %s7, %s5
  $region1: #{tpu_custom_call.1} parent=0
    #allocation2 [shape = 'u8[8192]{0}', space=vmem, size = 0x2000, scoped, tag = 'input window, operand 0, single buffered']
    #allocation3 [shape = 's32[1]{0}', space=sflag, size = 0x4, scoped, tag = 'scoped memory for tpu_custom_call.1']
    #allocation4 [shape = 's32[1]{0}', space=sflag, size = 0x4, scoped, tag = 'scoped memory for tpu_custom_call.1']
    #allocation5 [shape = 'u8[16384]{0}', space=vmem, size = 0x4000, scoped, tag = 'input window, operand 1, single buffered']
    #allocation6 [shape = 's32[1]{0}', space=sflag, size = 0x4, scoped, tag = 'scoped memory for tpu_custom_call.1']
    #allocation7 [shape = 'u8[8192]{0}', space=vmem, size = 0x2000, scoped, tag = 'output window, operand 0, single buffered']
    #allocation8 [shape = 'u8[1024]{0}', space=vmem, size = 0x400, scoped, tag = 'output window, operand 1, single buffered']
    #allocation9 [shape = 's32[1]{0}', space=sflag, size = 0x4, scoped, tag = 'scoped memory for tpu_custom_call.1']
    %9 = vsyncpa [#allocation3], 0
    %10 = vsyncpa [#allocation6], 0
    %11 = vsyncpa [#allocation4], 0
    %12 = vsyncpa [#allocation9], 0
    // Predicated region
    $region2: #{tpu_custom_call.1} parent=1 // pred_check
      _
    $region3: #{tpu_custom_call.1} parent=1 // pred_check_branch
      %14 = sbr.rel (0) target = $region5
    $region4: #{tpu_custom_call.1} parent=1 // pred_region
      %16 = vsyncadd [#allocation3], 0
      %s17 = sshll.u32 %s0, 4
      %s18 = int_to_ptr.hbm [resolvable:$true] %s17
      %s19 = sshll.u32 [#allocation2], 4
      %s20 = int_to_ptr.vmem [resolvable:$true] %s19
      %25 = dma.hbm_to_vmem [thread:$0]  %s18, 256, %s20, [#allocation3], 128, 128, 8
    $region5: #{tpu_custom_call.1} parent=1 // pred_fallthru
      _
    // Predicated region
    $region6: #{tpu_custom_call.1} parent=1 // pred_check
      _
    $region7: #{tpu_custom_call.1} parent=1 // pred_check_branch
      %27 = sbr.rel (0) target = $region9
    $region8: #{tpu_custom_call.1} parent=1 // pred_region
      %29 = vsyncadd [#allocation6], 0
      %s30 = sshll.u32 %s1, 4
      %s31 = int_to_ptr.hbm [resolvable:$true] %s30
      %s32 = sshll.u32 [#allocation5], 4
      %s33 = int_to_ptr.vmem [resolvable:$true] %s32
      %38 = dma.hbm_to_vmem [thread:$0]  %s31, 512, %s33, [#allocation6], 128, 128, 8
    $region9: #{tpu_custom_call.1} parent=1 // pred_fallthru
      _
    // Predicated region
    $region10: #{tpu_custom_call.1} parent=1 // pred_check
      _
    $region11: #{tpu_custom_call.1} parent=1 // pred_check_branch
      %40 = sbr.rel (0) target = $region13
    $region12: #{tpu_custom_call.1} parent=1 // pred_region
      %42 = dma.done [#allocation3], 256
    $region13: #{tpu_custom_call.1} parent=1 // pred_fallthru
      _
    // Predicated region
    $region14: #{tpu_custom_call.1} parent=1 // pred_check
      _
    $region15: #{tpu_custom_call.1} parent=1 // pred_check_branch
      %44 = sbr.rel (0) target = $region17
    $region16: #{tpu_custom_call.1} parent=1 // pred_region
      %46 = dma.done [#allocation6], 512
    $region17: #{tpu_custom_call.1} parent=1 // pred_fallthru
      _
    %v47 = vld [vmem:[#allocation2] sm:$0xff]
    %v48 = vld [vmem:[#allocation2 + $0x8] sm:$0xff]
    %v49 = vld [vmem:[#allocation5] sm:$0xff]
    %v50 = vld [vmem:[#allocation5 + $0x8] sm:$0xff]
    %v51 = vld [vmem:[#allocation5 + $0x10] sm:$0xff]
    %v52 = vld [vmem:[#allocation5 + $0x18] sm:$0xff]
    %vm53 = vcmask 261120
    %v55 = vsel %vm53, %v47, 0
    %v58 = vsel %vm53, %v48, 0
    %60 = vmatpush.msra.mxu0 0.0
    %61 = vmatpush.msra.mxu0 0.0
    %62 = vmatpush.msra.mxu0 0.0
    %63 = vmatpush.msra.mxu0 0.0
    %64 = vmatpush.msra.mxu0 0.0
    %65 = vmatpush.msra.mxu0 0.0
    %66 = vmatpush.msra.mxu0 0.0
    %67 = vmatpush.msra.mxu0 0.0
    %68 = vmatpush.msra.mxu0 0.0
    %69 = vmatpush.msra.mxu0 0.0
    %70 = vmatpush.msra.mxu0 0.0
    %71 = vmatpush.msra.mxu0 0.0
    %72 = vmatpush.msra.mxu0 %v52
    %73 = vmatpush.msra.mxu0 %v51
    %74 = vmatpush.msra.mxu0 %v50
    %75 = vmatpush.msra.mxu0 %v49
    %76 = vmatmul.f32.gmra.mxu0 %v55
    %v77 = vpop.f32.mrf.mxu0
    %v78 = vadd.f32 0.0, %v77
    %79 = vmatmul.f32.gmra.mxu0 %v58
    %v80 = vpop.f32.mrf.mxu0
    %v81 = vadd.f32 0.0, %v80
    %82 = vdwg.mxu0
    %vm83 = vcmask 130048
    %v85 = vsel %vm83, %v78, 0
    %87 = vmatpush.xpose.msra.mxu0 0.0
    %88 = vmatpush.xpose.msra.mxu0 0.0
    %89 = vmatpush.xpose.msra.mxu0 0.0
    %90 = vmatpush.xpose.msra.mxu0 0.0
    %91 = vmatpush.xpose.msra.mxu0 0.0
    %92 = vmatpush.xpose.msra.mxu0 0.0
    %93 = vmatpush.xpose.msra.mxu0 0.0
    %94 = vmatpush.xpose.msra.mxu0 0.0
    %95 = vmatpush.xpose.msra.mxu0 0.0
    %96 = vmatpush.xpose.msra.mxu0 0.0
    %97 = vmatpush.xpose.msra.mxu0 0.0
    %98 = vmatpush.xpose.msra.mxu0 0.0
    %99 = vmatpush.xpose.msra.mxu0 0.0
    %100 = vmatpush.xpose.msra.mxu0 0.0
    %101 = vmatpush.xpose.msra.mxu0 0.0
    %102 = vmatpush.xpose.msra.mxu0 %v85
    %103 = vmatmul.f32.gmra.mxu0 %v85
    %v104 = vpop.f32.mrf.mxu0
    %v105 = vadd.f32 0.0, %v104
    %106 = vdwg.mxu0
    %v108 = vsel %vm83, %v81, 0
    %110 = vmatpush.xpose.msra.mxu0 0.0
    %111 = vmatpush.xpose.msra.mxu0 0.0
    %112 = vmatpush.xpose.msra.mxu0 0.0
    %113 = vmatpush.xpose.msra.mxu0 0.0
    %114 = vmatpush.xpose.msra.mxu0 0.0
    %115 = vmatpush.xpose.msra.mxu0 0.0
    %116 = vmatpush.xpose.msra.mxu0 0.0
    %117 = vmatpush.xpose.msra.mxu0 0.0
    %118 = vmatpush.xpose.msra.mxu0 0.0
    %119 = vmatpush.xpose.msra.mxu0 0.0
    %120 = vmatpush.xpose.msra.mxu0 0.0
    %121 = vmatpush.xpose.msra.mxu0 0.0
    %122 = vmatpush.xpose.msra.mxu0 0.0
    %123 = vmatpush.xpose.msra.mxu0 0.0
    %124 = vmatpush.xpose.msra.mxu0 0.0
    %125 = vmatpush.xpose.msra.mxu0 %v108
    %126 = vmatmul.f32.gmra.mxu0 %v108
    %v127 = vpop.f32.mrf.mxu0
    %v128 = vadd.f32 0.0, %v127
    %129 = vdwg.mxu0
    %v130 = vmul.f32 %v78, %v78
    %v131 = vmul.f32 %v81, %v81
    %v132 = vsel %vm83, %v130, 0.0
    %133 = vadd.xlane.f32.xlu0 %v132
    %v134 = vpop.xlane.xlu0 %133
    %v135 = vsel %vm83, %v131, 0.0
    %136 = vadd.xlane.f32.xlu0 %v135
    %v137 = vpop.xlane.xlu0 %136
    %v140 = vlaneseq
    %v141 = vand.u32 %v140, 127
    %v142 = vperm.slane %v134, %v141
    %v143 = vperm.slane %v137, %v141
    %vm144 = vcmask 1042434
    %v145 = vsel %vm144, %v142, %v142
    %vm146 = vcmask 1043459
    %v147 = vsel %vm146, %v142, %v145
    %vm148 = vcmask 1044484
    %v149 = vsel %vm148, %v142, %v147
    %vm150 = vcmask 1045509
    %v151 = vsel %vm150, %v142, %v149
    %vm152 = vcmask 1046534
    %v153 = vsel %vm152, %v142, %v151
    %vm154 = vcmask 1047559
    %v155 = vsel %vm154, %v142, %v153
    %v156 = vsel %vm144, %v143, %v143
    %v157 = vsel %vm146, %v143, %v156
    %v158 = vsel %vm148, %v143, %v157
    %v159 = vsel %vm150, %v143, %v158
    %v160 = vsel %vm152, %v143, %v159
    %v161 = vsel %vm154, %v143, %v160
    %v164 = vadd.f32 %v134, %v155
    %v165 = vadd.f32 %v137, %v161
    %v166 = vmul.f32 %v105, 2.0
    %v167 = vmul.f32 %v128, 2.0
    %v168 = vsub.f32 %v164, %v166
    %v169 = vsub.f32 %v165, %v167
    %v170 = vmax.f32 %v168, 0.0
    %v171 = vmax.f32 %v169, 0.0
    %vm172 = vcmask 64512
    %173 = vst.msk [vmem:[#allocation7] sm:$0xff] %vm172, %v170
    %174 = vst.msk [vmem:[#allocation7 + $0x8] sm:$0xff] %vm172, %v171
    %177 = vrot.lane.b32.xlu0 %v130, 112
    %v178 = vpop.permute.xlu0 %177
    %179 = vrot.lane.b32.xlu0 %v131, 112
    %v180 = vpop.permute.xlu0 %179
    %v183 = vsel %vm83, %v178, 0.0
    %184 = vadd.xlane.f32.xlu0 %v183
    %v185 = vpop.xlane.xlu0 %184
    %v186 = vsel %vm83, %v180, 0.0
    %187 = vadd.xlane.f32.xlu0 %v186
    %v188 = vpop.xlane.xlu0 %187
    %v191 = vperm.slane %v185, %v141
    %v192 = vperm.slane %v188, %v141
    %vm195 = vcmask 57344
    %196 = vst.msk [vmem:[#allocation8] sm:$0x1] %vm195, %v191
    %197 = vst.msk [vmem:[#allocation8 + $0x1] sm:$0x1] %vm195, %v192
    // Predicated region
    $region18: #{tpu_custom_call.1} parent=1 // pred_check
      _
    $region19: #{tpu_custom_call.1} parent=1 // pred_check_branch
      %199 = sbr.rel (0) target = $region21
    $region20: #{tpu_custom_call.1} parent=1 // pred_region
      %201 = vsyncadd [#allocation4], 0
      %s202 = sshll.u32 [#allocation7], 4
      %s203 = int_to_ptr.vmem [resolvable:$true] %s202
      %s204 = sshll.u32 %s2, 4
      %s205 = int_to_ptr.hbm [resolvable:$true] %s204
      %210 = dma.vmem_to_hbm [thread:$0]  %s203, 256, %s205, [#allocation4], 128, 128, 8
    $region21: #{tpu_custom_call.1} parent=1 // pred_fallthru
      _
    // Predicated region
    $region22: #{tpu_custom_call.1} parent=1 // pred_check
      _
    $region23: #{tpu_custom_call.1} parent=1 // pred_check_branch
      %212 = sbr.rel (0) target = $region25
    $region24: #{tpu_custom_call.1} parent=1 // pred_region
      %214 = vsyncadd [#allocation9], 0
      %s215 = sshll.u32 [#allocation8], 4
      %s216 = int_to_ptr.vmem [resolvable:$true] %s215
      %s217 = sshll.u32 %s3, 4
      %s218 = int_to_ptr.hbm [resolvable:$true] %s217
      %223 = dma.vmem_to_hbm [thread:$0]  %s216, 32, %s218, [#allocation9], 16, 16, 1
    $region25: #{tpu_custom_call.1} parent=1 // pred_fallthru
      _
    // Predicated region
    $region26: #{tpu_custom_call.1} parent=1 // pred_check
      _
    $region27: #{tpu_custom_call.1} parent=1 // pred_check_branch
      %225 = sbr.rel (0) target = $region29
    $region28: #{tpu_custom_call.1} parent=1 // pred_region
      %227 = dma.done [#allocation4], 256
    $region29: #{tpu_custom_call.1} parent=1 // pred_fallthru
      _
    // Predicated region
    $region30: #{tpu_custom_call.1} parent=1 // pred_check
      _
    $region31: #{tpu_custom_call.1} parent=1 // pred_check_branch
      %229 = sbr.rel (0) target = $region33
    $region32: #{tpu_custom_call.1} parent=1 // pred_region
      %231 = dma.done [#allocation9], 32
    $region33: #{tpu_custom_call.1} parent=1 // pred_fallthru
      _
    %232 = vsyncpa [#allocation3], 1
    %233 = vsyncpa [#allocation6], 1
    %234 = vsyncpa [#allocation4], 1
    %235 = vsyncpa [#allocation9], 1

</llo_original>
